<compile_context>
chip_gen: v7x
topology: tpu7x:2x2x1
jax: 0.10.0
libtpu: 0.0.40
codegen_flags: <defaults>
</compile_context>

<pallas_src>
import math

import jax
import jax.numpy as jnp
from jax.experimental import pallas as pl
from jax.experimental.pallas import tpu as pltpu


LANE = 128      # vreg lane width (last dim). TODO(synk): pad to 256 on v6e/v7x once widths >= 128.
SUBLANE = 8     # f32 sublane width (second-to-last dim)
_SMALL_BATCH_SINGLE_STEP = 512   # <= this many (8-padded) rows -> one grid step
_LARGE_BATCH_TILE = 256          # default row tile for big batches (multiple of 8, >=128)


def _round_up(n: int, m: int) -> int:
    return ((n + m - 1) // m) * m


# Activation zoo mirroring the module's activation_dic (default: relu).
_ACTIVATIONS = {
    "relu": lambda x: jnp.maximum(x, 0.0),
    "leaky_relu": lambda x: jnp.where(x >= 0, x, 0.01 * x),   # nn.LeakyReLU default slope
    "gelu": lambda x: jax.nn.gelu(x, approximate=False),
    "sigmoid": jax.nn.sigmoid,
    "tanh": jnp.tanh,
}
_EUP_ACTS = ("gelu", "sigmoid", "tanh")


# ----------------------------- Fused Pallas kernel ----------------------------
def _make_mlp_kernel(n_layers: int, act_fn, mxu_dtype):
    """Fused MLP kernel. Ref order: (x, w1, b1, ..., wn, bn, out).

    Activation after every layer except the last (matches FFNN_non_linear.forward).
    MXU operands are `mxu_dtype`; accumulation, bias add and activation are f32.
    """
    def kernel(*refs):
        x_ref = refs[0]
        o_ref = refs[1 + 2 * n_layers]
        h = x_ref[...].astype(jnp.float32)
        for i in range(n_layers):
            w = refs[1 + 2 * i][...]                      # (DinP, DoutP) in mxu_dtype
            b = refs[2 + 2 * i][...]                      # (1, DoutP) f32, broadcasts over rows
            h = jnp.dot(h.astype(mxu_dtype), w,
                        preferred_element_type=jnp.float32) + b
            if i < n_layers - 1:
                h = act_fn(h)
        o_ref[...] = h.astype(o_ref.dtype)
    return kernel


def _pad_params(params, mxu_dtype):
    """Zero-pad each (W_t:(Din,Dout), b:(1,Dout)) to 128-lane multiples.

    Weights are stored in `mxu_dtype` (halves weight DMA for bf16); biases stay f32.
    """
    padded = []
    for w_t, b in params:
        din, dout = w_t.shape
        dinp, doutp = _round_up(din, LANE), _round_up(dout, LANE)
        w_p = jnp.zeros((dinp, doutp), mxu_dtype).at[:din, :dout].set(w_t.astype(mxu_dtype))
        b_p = jnp.zeros((1, doutp), jnp.float32).at[:, :dout].set(
            b.reshape(1, dout).astype(jnp.float32))
        padded.append((w_p, b_p))
    return padded


def make_ffnn_forward(params, *, activation="relu", mxu_dtype=jnp.bfloat16,
                      tile_b=None, single_buffer_weights=True):
    """Pad/cast params ONCE and return a jitted fused forward(x) callable.

    params: list of (W_t:(Din,Dout), b:(1,Dout)) in f32.
    """
    n_layers = len(params)
    din = params[0][0].shape[0]
    dout = params[-1][0].shape[1]
    act_fn = _ACTIVATIONS[activation]

    padded = _pad_params(params, mxu_dtype)
    dinp = padded[0][0].shape[0]
    doutp = padded[-1][0].shape[1]
    flat_params = [a for wb in padded for a in wb]

    # Grid-invariant weights/biases: constant block index keeps them VMEM-resident
    # across all batch-grid steps; single buffering halves that residency.
    def _const_spec(shape):
        if single_buffer_weights:
            return pl.BlockSpec(shape, lambda i: (0, 0), pipeline_mode=pl.Buffered(1))
        return pl.BlockSpec(shape, lambda i: (0, 0))

    weight_specs = []
    for w_p, b_p in padded:
        weight_specs.append(_const_spec(w_p.shape))
        weight_specs.append(_const_spec(b_p.shape))

    kernel = _make_mlp_kernel(n_layers, act_fn, mxu_dtype)

    @jax.jit
    def forward(x):
        B = x.shape[0]
        bp8 = _round_up(B, SUBLANE)
        if tile_b is not None:
            tb = min(max(SUBLANE, _round_up(tile_b, SUBLANE)), bp8)
        elif bp8 <= _SMALL_BATCH_SINGLE_STEP:
            tb = bp8                      # whole batch in one grid step: no per-step overhead
        else:
            tb = _LARGE_BATCH_TILE        # >=128-row tiles feed the MXU properly
        bp = _round_up(B, tb)
        grid = (bp // tb,)

        # Pad batch + feature dims so every load/store is lane-dense and MXU tiles are full.
        x_p = jnp.zeros((bp, dinp), x.dtype).at[:B, :din].set(x)

        in_specs = [pl.BlockSpec((tb, dinp), lambda i: (i, 0))] + weight_specs
        out_spec = pl.BlockSpec((tb, doutp), lambda i: (i, 0))

        # Scheduler hints.
        flops = 2 * bp * sum(w.shape[0] * w.shape[1] for w, _ in padded)
        transcendentals = 0
        if activation in _EUP_ACTS:
            transcendentals = bp * sum(w.shape[1] for w, _ in padded[:-1])
        bytes_accessed = (x_p.size * x_p.dtype.itemsize
                          + sum(w.size * w.dtype.itemsize + b.size * b.dtype.itemsize
                                for w, b in padded)
                          + bp * doutp * x.dtype.itemsize)
        cost = pl.CostEstimate(flops=flops, transcendentals=transcendentals,
                               bytes_accessed=bytes_accessed)

        # VMEM budget: the fused design keeps EVERY layer's weights resident at once.
        weight_bufs = 1 if single_buffer_weights else 2
        vmem_needed = (weight_bufs * sum(w.size * w.dtype.itemsize + b.size * b.dtype.itemsize
                                         for w, b in padded)
                       + 2 * tb * dinp * x.dtype.itemsize      # double-buffered x tiles
                       + 2 * tb * doutp * x.dtype.itemsize)    # double-buffered out tiles
        cp_kwargs = dict(dimension_semantics=("parallel",))    # batch tiles shard across TCs (v7x)
        if 2 * vmem_needed > 32 * 1024 * 1024:
            # TODO(synk): v7x physical VMEM is only 64 MiB; if this overflows, split the
            # fusion or K/N-tile the weights with a reduction grid axis instead.
            cp_kwargs["vmem_limit_bytes"] = int(2 * vmem_needed)

        out_p = pl.pallas_call(
            kernel,
            out_shape=jax.ShapeDtypeStruct((bp, doutp), x.dtype),
            grid=grid,
            in_specs=in_specs,
            out_specs=out_spec,
            compiler_params=pltpu.CompilerParams(**cp_kwargs),
            cost_estimate=cost,
        )(x_p, *flat_params)

        # Lane-dense (tb, 128) output block is the right default; real columns sliced here.
        return out_p[:B, :dout]

    return forward


# ------------------------- Parameter construction ----------------------------
def layer_utility(in_size, out_size, nodes, n_hidd_layers):
    """Mirror of FFNN_non_linear.layer_utility: list of (in_c, out_c)."""
    layer_nodes = list(nodes)
    layer_nodes.append(out_size)
    layer_nodes.insert(0, in_size)
    channels = []
    for ind in range(n_hidd_layers + 1):
        channels.append((layer_nodes[:-1][ind], layer_nodes[1:][ind]))
    return channels


def init_params(key, channels_tuple, init_w="x_u", dtype=jnp.float32):
    """Deterministic init mimicking the PyTorch module's initialize_weights()."""
    params = []
    for (in_c, out_c) in channels_tuple:
        key, kw, kb = jax.random.split(key, 3)
        if init_w == "x_u":
            bound = math.sqrt(6.0 / (in_c + out_c))
            w = jax.random.uniform(kw, (out_c, in_c), dtype, -bound, bound)
            b = jax.random.uniform(kb, (out_c,), dtype, 0.0, 1.0)
        elif init_w == "x_n":
            std = math.sqrt(2.0 / (in_c + out_c))
            w = std * jax.random.normal(kw, (out_c, in_c), dtype)
            b = jax.random.normal(kb, (out_c,), dtype)
        elif init_w == "ones":
            w = jnp.ones((out_c, in_c), dtype)
            b = jnp.ones((out_c,), dtype)
        elif init_w == "zeros":
            w = jnp.zeros((out_c, in_c), dtype)
            b = jnp.zeros((out_c,), dtype)
        else:
            bound = 1.0 / math.sqrt(in_c)
            w = jax.random.uniform(kw, (out_c, in_c), dtype, -bound, bound)
            b = jax.random.uniform(kb, (out_c,), dtype, -bound, bound)
        # glue: pre-transpose to (in_c, out_c) so the hot path is x @ W; bias as (1, out_c)
        params.append((w.T, b.reshape(1, out_c)))
    return params


def ffnn_reference(x, params, activation="relu", mxu_dtype=jnp.float32):
    """Pure-JAX reference (unpadded). With mxu_dtype=bf16 it mirrors the kernel's casts."""
    n = len(params)
    act = _ACTIVATIONS[activation]
    h = x.astype(jnp.float32)
    for i, (w_t, b) in enumerate(params):
        h = jnp.dot(h.astype(mxu_dtype), w_t.astype(mxu_dtype),
                    preferred_element_type=jnp.float32) + b.astype(jnp.float32)
        if i < n - 1:
            h = act(h)
    return h.astype(x.dtype)


# ----------------------------------- Main -------------------------------------
if __name__ == "__main__":
    # Module-consistent small configuration:
    #   input_size=35 (module default), two hidden layers of 32 nodes, output_size=1.
    input_size = 35
    output_size = 1
    n_hidd_layers = 2
    nodes = [32, 32]
    batch = 16
    activation = "relu"

    channels = layer_utility(input_size, output_size, nodes, n_hidd_layers)

    key = jax.random.PRNGKey(0)
    key, kx = jax.random.split(key)
    x = jax.random.normal(kx, (batch, input_size), jnp.float32)
    params = init_params(key, channels, init_w="x_u", dtype=jnp.float32)

    def _build_and_run(mxu_dtype, single_buffer_weights):
        fwd = make_ffnn_forward(params, activation=activation, mxu_dtype=mxu_dtype,
                                single_buffer_weights=single_buffer_weights)
        return jax.block_until_ready(fwd(x))

    try:
        out_f32 = _build_and_run(jnp.float32, True)    # f32 parity mode (exact check)
        out_bf16 = _build_and_run(jnp.bfloat16, True)  # bf16-at-MXU performance mode
    except Exception:
        # pl.Buffered(1) (single-buffered grid-invariant weights) not supported by this
        # jax version -> fall back to default double buffering.
        out_f32 = _build_and_run(jnp.float32, False)
        out_bf16 = _build_and_run(jnp.bfloat16, False)

    ref_f32 = ffnn_reference(x, params, activation=activation, mxu_dtype=jnp.float32)

    assert out_f32.shape == (batch, output_size), out_f32.shape
    assert out_bf16.shape == (batch, output_size), out_bf16.shape
    # Exact parity of the kernel structure (f32 operands) vs the f32 reference.
    assert jnp.allclose(out_f32, ref_f32, atol=1e-5, rtol=1e-5), "f32 parity mismatch"
    # bf16-at-MXU mode: relaxed tolerance (bf16 operand rounding, f32 accumulate).
    assert jnp.allclose(out_bf16, ref_f32, atol=1e-1, rtol=1e-1), "bf16 mode mismatch"

    print("KERNEL_OK")
</pallas_src>

<mosaic_0001>
module attributes {stable_mosaic.version = 11 : i64} {
  func.func @kernel(%arg0: i32, %arg1: memref<16x128xf32, #tpu.memory_space<vmem>>, %arg2: memref<128x128xf32, #tpu.memory_space<vmem>>, %arg3: memref<1x128xf32, #tpu.memory_space<vmem>>, %arg4: memref<128x128xf32, #tpu.memory_space<vmem>>, %arg5: memref<1x128xf32, #tpu.memory_space<vmem>>, %arg6: memref<128x128xf32, #tpu.memory_space<vmem>>, %arg7: memref<1x128xf32, #tpu.memory_space<vmem>>, %arg8: memref<16x128xf32, #tpu.memory_space<vmem>>) attributes {dimension_semantics = [#tpu.dimension_semantics<parallel>], iteration_bounds = array<i64: 1>, scalar_prefetch = 0 : i64, scratch_operands = 0 : i64, tpu.core_type = #tpu.core_type<tc>, window_params = [{transform_indices = @transform_0, window_bounds = array<i64: 16, 128>}, {pipeline_mode = #tpu.pipeline_mode<synchronous>, transform_indices = @transform_1, window_bounds = array<i64: 128, 128>}, {pipeline_mode = #tpu.pipeline_mode<synchronous>, transform_indices = @transform_2, window_bounds = array<i64: 1, 128>}, {pipeline_mode = #tpu.pipeline_mode<synchronous>, transform_indices = @transform_3, window_bounds = array<i64: 128, 128>}, {pipeline_mode = #tpu.pipeline_mode<synchronous>, transform_indices = @transform_4, window_bounds = array<i64: 1, 128>}, {pipeline_mode = #tpu.pipeline_mode<synchronous>, transform_indices = @transform_5, window_bounds = array<i64: 128, 128>}, {pipeline_mode = #tpu.pipeline_mode<synchronous>, transform_indices = @transform_6, window_bounds = array<i64: 1, 128>}, {transform_indices = @transform_7, window_bounds = array<i64: 16, 128>}]} {
    %c0 = arith.constant 0 : index
    %c0_0 = arith.constant 0 : index
    %0 = vector.load %arg1[%c0, %c0_0] : memref<16x128xf32, #tpu.memory_space<vmem>>, vector<16x128xf32>
    %c0_1 = arith.constant 0 : index
    %c0_2 = arith.constant 0 : index
    %1 = vector.load %arg2[%c0_1, %c0_2] : memref<128x128xf32, #tpu.memory_space<vmem>>, vector<128x128xf32>
    %c0_3 = arith.constant 0 : index
    %c0_4 = arith.constant 0 : index
    %2 = vector.load %arg3[%c0_3, %c0_4] : memref<1x128xf32, #tpu.memory_space<vmem>>, vector<1x128xf32>
    %cst = arith.constant dense<0.000000e+00> : vector<16x128xf32>
    %3 = tpu.matmul %0, %1, %cst {dimension_numbers = #tpu.dot_dimension_numbers<[1], [0], [0], [1], [0, 0, 1, 1], [], []>} : vector<16x128xf32>, vector<128x128xf32>, vector<16x128xf32> -> vector<16x128xf32>
    %4 = vector.broadcast %2 : vector<1x128xf32> to vector<16x128xf32>
    %5 = arith.addf %3, %4 : vector<16x128xf32>
    %cst_5 = arith.constant 0.000000e+00 : f32
    %6 = vector.broadcast %cst_5 : f32 to vector<16x128xf32>
    %7 = arith.maximumf %5, %6 : vector<16x128xf32>
    %c0_6 = arith.constant 0 : index
    %c0_7 = arith.constant 0 : index
    %8 = vector.load %arg4[%c0_6, %c0_7] : memref<128x128xf32, #tpu.memory_space<vmem>>, vector<128x128xf32>
    %c0_8 = arith.constant 0 : index
    %c0_9 = arith.constant 0 : index
    %9 = vector.load %arg5[%c0_8, %c0_9] : memref<1x128xf32, #tpu.memory_space<vmem>>, vector<1x128xf32>
    %cst_10 = arith.constant dense<0.000000e+00> : vector<16x128xf32>
    %10 = tpu.matmul %7, %8, %cst_10 {dimension_numbers = #tpu.dot_dimension_numbers<[1], [0], [0], [1], [0, 0, 1, 1], [], []>} : vector<16x128xf32>, vector<128x128xf32>, vector<16x128xf32> -> vector<16x128xf32>
    %11 = vector.broadcast %9 : vector<1x128xf32> to vector<16x128xf32>
    %12 = arith.addf %10, %11 : vector<16x128xf32>
    %cst_11 = arith.constant 0.000000e+00 : f32
    %13 = vector.broadcast %cst_11 : f32 to vector<16x128xf32>
    %14 = arith.maximumf %12, %13 : vector<16x128xf32>
    %c0_12 = arith.constant 0 : index
    %c0_13 = arith.constant 0 : index
    %15 = vector.load %arg6[%c0_12, %c0_13] : memref<128x128xf32, #tpu.memory_space<vmem>>, vector<128x128xf32>
    %c0_14 = arith.constant 0 : index
    %c0_15 = arith.constant 0 : index
    %16 = vector.load %arg7[%c0_14, %c0_15] : memref<1x128xf32, #tpu.memory_space<vmem>>, vector<1x128xf32>
    %cst_16 = arith.constant dense<0.000000e+00> : vector<16x128xf32>
    %17 = tpu.matmul %14, %15, %cst_16 {dimension_numbers = #tpu.dot_dimension_numbers<[1], [0], [0], [1], [0, 0, 1, 1], [], []>} : vector<16x128xf32>, vector<128x128xf32>, vector<16x128xf32> -> vector<16x128xf32>
    %18 = vector.broadcast %16 : vector<1x128xf32> to vector<16x128xf32>
    %19 = arith.addf %17, %18 : vector<16x128xf32>
    %c0_17 = arith.constant 0 : index
    %c0_18 = arith.constant 0 : index
    %20 = vector.load %arg8[%c0_17, %c0_18] : memref<16x128xf32, #tpu.memory_space<vmem>>, vector<16x128xf32>
    tpu.vector_store %arg8[%c0_17, %c0_18], %19 {strides = array<i32>} : memref<16x128xf32, #tpu.memory_space<vmem>>, vector<16x128xf32>,
    return
  }
  func.func @transform_0(%arg0: i32) -> (i32, i32) {
    %c0_i32 = arith.constant 0 : i32
    %c0_i32_0 = arith.constant 0 : i32
    return %arg0, %c0_i32 : i32, i32
  }
  func.func @transform_1(%arg0: i32) -> (i32, i32) {
    %c0_i32 = arith.constant 0 : i32
    %c0_i32_0 = arith.constant 0 : i32
    %c0_i32_1 = arith.constant 0 : i32
    return %c0_i32, %c0_i32_0 : i32, i32
  }
  func.func @transform_2(%arg0: i32) -> (i32, i32) {
    %c0_i32 = arith.constant 0 : i32
    %c0_i32_0 = arith.constant 0 : i32
    %c0_i32_1 = arith.constant 0 : i32
    return %c0_i32, %c0_i32_0 : i32, i32
  }
  func.func @transform_3(%arg0: i32) -> (i32, i32) {
    %c0_i32 = arith.constant 0 : i32
    %c0_i32_0 = arith.constant 0 : i32
    %c0_i32_1 = arith.constant 0 : i32
    return %c0_i32, %c0_i32_0 : i32, i32
  }
  func.func @transform_4(%arg0: i32) -> (i32, i32) {
    %c0_i32 = arith.constant 0 : i32
    %c0_i32_0 = arith.constant 0 : i32
    %c0_i32_1 = arith.constant 0 : i32
    return %c0_i32, %c0_i32_0 : i32, i32
  }
  func.func @transform_5(%arg0: i32) -> (i32, i32) {
    %c0_i32 = arith.constant 0 : i32
    %c0_i32_0 = arith.constant 0 : i32
    %c0_i32_1 = arith.constant 0 : i32
    return %c0_i32, %c0_i32_0 : i32, i32
  }
  func.func @transform_6(%arg0: i32) -> (i32, i32) {
    %c0_i32 = arith.constant 0 : i32
    %c0_i32_0 = arith.constant 0 : i32
    %c0_i32_1 = arith.constant 0 : i32
    return %c0_i32, %c0_i32_0 : i32, i32
  }
  func.func @transform_7(%arg0: i32) -> (i32, i32) {
    %c0_i32 = arith.constant 0 : i32
    %c0_i32_0 = arith.constant 0 : i32
    return %arg0, %c0_i32 : i32, i32
  }
}

module attributes {stable_mosaic.version = 11 : i64} {
  func.func @kernel(%arg0: i32, %arg1: memref<16x128xf32, #tpu.memory_space<vmem>>, %arg2: memref<128x128xf32, #tpu.memory_space<vmem>>, %arg3: memref<1x128xf32, #tpu.memory_space<vmem>>, %arg4: memref<128x128xf32, #tpu.memory_space<vmem>>, %arg5: memref<1x128xf32, #tpu.memory_space<vmem>>, %arg6: memref<128x128xf32, #tpu.memory_space<vmem>>, %arg7: memref<1x128xf32, #tpu.memory_space<vmem>>, %arg8: memref<16x128xf32, #tpu.memory_space<vmem>>) attributes {dimension_semantics = [#tpu.dimension_semantics<parallel>], iteration_bounds = array<i64: 1>, scalar_prefetch = 0 : i64, scratch_operands = 0 : i64, tpu.core_type = #tpu.core_type<tc>, window_params = [{transform_indices = @transform_0, window_bounds = array<i64: 16, 128>}, {pipeline_mode = #tpu.pipeline_mode<synchronous>, transform_indices = @transform_1, window_bounds = array<i64: 128, 128>}, {pipeline_mode = #tpu.pipeline_mode<synchronous>, transform_indices = @transform_2, window_bounds = array<i64: 1, 128>}, {pipeline_mode = #tpu.pipeline_mode<synchronous>, transform_indices = @transform_3, window_bounds = array<i64: 128, 128>}, {pipeline_mode = #tpu.pipeline_mode<synchronous>, transform_indices = @transform_4, window_bounds = array<i64: 1, 128>}, {pipeline_mode = #tpu.pipeline_mode<synchronous>, transform_indices = @transform_5, window_bounds = array<i64: 128, 128>}, {pipeline_mode = #tpu.pipeline_mode<synchronous>, transform_indices = @transform_6, window_bounds = array<i64: 1, 128>}, {transform_indices = @transform_7, window_bounds = array<i64: 16, 128>}]} {
    %c0 = arith.constant 0 : index
    %c0_0 = arith.constant 0 : index
    %0 = vector.load %arg1[%c0, %c0_0] : memref<16x128xf32, #tpu.memory_space<vmem>>, vector<16x128xf32>
    %c0_1 = arith.constant 0 : index
    %c0_2 = arith.constant 0 : index
    %1 = vector.load %arg2[%c0_1, %c0_2] : memref<128x128xf32, #tpu.memory_space<vmem>>, vector<128x128xf32>
    %c0_3 = arith.constant 0 : index
    %c0_4 = arith.constant 0 : index
    %2 = vector.load %arg3[%c0_3, %c0_4] : memref<1x128xf32, #tpu.memory_space<vmem>>, vector<1x128xf32>
    %cst = arith.constant dense<0.000000e+00> : vector<16x128xf32>
    %3 = tpu.matmul %0, %1, %cst {dimension_numbers = #tpu.dot_dimension_numbers<[1], [0], [0], [1], [0, 0, 1, 1], [], []>} : vector<16x128xf32>, vector<128x128xf32>, vector<16x128xf32> -> vector<16x128xf32>
    %4 = vector.broadcast %2 : vector<1x128xf32> to vector<16x128xf32>
    %5 = arith.addf %3, %4 : vector<16x128xf32>
    %cst_5 = arith.constant 0.000000e+00 : f32
    %6 = vector.broadcast %cst_5 : f32 to vector<16x128xf32>
    %7 = arith.maximumf %5, %6 : vector<16x128xf32>
    %c0_6 = arith.constant 0 : index
    %c0_7 = arith.constant 0 : index
    %8 = vector.load %arg4[%c0_6, %c0_7] : memref<128x128xf32, #tpu.memory_space<vmem>>, vector<128x128xf32>
    %c0_8 = arith.constant 0 : index
    %c0_9 = arith.constant 0 : index
    %9 = vector.load %arg5[%c0_8, %c0_9] : memref<1x128xf32, #tpu.memory_space<vmem>>, vector<1x128xf32>
    %cst_10 = arith.constant dense<0.000000e+00> : vector<16x128xf32>
    %10 = tpu.matmul %7, %8, %cst_10 {dimension_numbers = #tpu.dot_dimension_numbers<[1], [0], [0], [1], [0, 0, 1, 1], [], []>} : vector<16x128xf32>, vector<128x128xf32>, vector<16x128xf32> -> vector<16x128xf32>
    %11 = vector.broadcast %9 : vector<1x128xf32> to vector<16x128xf32>
    %12 = arith.addf %10, %11 : vector<16x128xf32>
    %cst_11 = arith.constant 0.000000e+00 : f32
    %13 = vector.broadcast %cst_11 : f32 to vector<16x128xf32>
    %14 = arith.maximumf %12, %13 : vector<16x128xf32>
    %c0_12 = arith.constant 0 : index
    %c0_13 = arith.constant 0 : index
    %15 = vector.load %arg6[%c0_12, %c0_13] : memref<128x128xf32, #tpu.memory_space<vmem>>, vector<128x128xf32>
    %c0_14 = arith.constant 0 : index
    %c0_15 = arith.constant 0 : index
    %16 = vector.load %arg7[%c0_14, %c0_15] : memref<1x128xf32, #tpu.memory_space<vmem>>, vector<1x128xf32>
    %cst_16 = arith.constant dense<0.000000e+00> : vector<16x128xf32>
    %17 = tpu.matmul %14, %15, %cst_16 {dimension_numbers = #tpu.dot_dimension_numbers<[1], [0], [0], [1], [0, 0, 1, 1], [], []>} : vector<16x128xf32>, vector<128x128xf32>, vector<16x128xf32> -> vector<16x128xf32>
    %18 = vector.broadcast %16 : vector<1x128xf32> to vector<16x128xf32>
    %19 = arith.addf %17, %18 : vector<16x128xf32>
    %c0_17 = arith.constant 0 : index
    %c0_18 = arith.constant 0 : index
    %20 = vector.load %arg8[%c0_17, %c0_18] : memref<16x128xf32, #tpu.memory_space<vmem>>, vector<16x128xf32>
    tpu.vector_store %arg8[%c0_17, %c0_18], %19 {strides = array<i32>} : memref<16x128xf32, #tpu.memory_space<vmem>>, vector<16x128xf32>,
    return
  }
  func.func @transform_0(%arg0: i32) -> (i32, i32) {
    %c0_i32 = arith.constant 0 : i32
    %c0_i32_0 = arith.constant 0 : i32
    return %arg0, %c0_i32 : i32, i32
  }
  func.func @transform_1(%arg0: i32) -> (i32, i32) {
    %c0_i32 = arith.constant 0 : i32
    %c0_i32_0 = arith.constant 0 : i32
    %c0_i32_1 = arith.constant 0 : i32
    return %c0_i32, %c0_i32_0 : i32, i32
  }
  func.func @transform_2(%arg0: i32) -> (i32, i32) {
    %c0_i32 = arith.constant 0 : i32
    %c0_i32_0 = arith.constant 0 : i32
    %c0_i32_1 = arith.constant 0 : i32
    return %c0_i32, %c0_i32_0 : i32, i32
  }
  func.func @transform_3(%arg0: i32) -> (i32, i32) {
    %c0_i32 = arith.constant 0 : i32
    %c0_i32_0 = arith.constant 0 : i32
    %c0_i32_1 = arith.constant 0 : i32
    return %c0_i32, %c0_i32_0 : i32, i32
  }
  func.func @transform_4(%arg0: i32) -> (i32, i32) {
    %c0_i32 = arith.constant 0 : i32
    %c0_i32_0 = arith.constant 0 : i32
    %c0_i32_1 = arith.constant 0 : i32
    return %c0_i32, %c0_i32_0 : i32, i32
  }
  func.func @transform_5(%arg0: i32) -> (i32, i32) {
    %c0_i32 = arith.constant 0 : i32
    %c0_i32_0 = arith.constant 0 : i32
    %c0_i32_1 = arith.constant 0 : i32
    return %c0_i32, %c0_i32_0 : i32, i32
  }
  func.func @transform_6(%arg0: i32) -> (i32, i32) {
    %c0_i32 = arith.constant 0 : i32
    %c0_i32_0 = arith.constant 0 : i32
    %c0_i32_1 = arith.constant 0 : i32
    return %c0_i32, %c0_i32_0 : i32, i32
  }
  func.func @transform_7(%arg0: i32) -> (i32, i32) {
    %c0_i32 = arith.constant 0 : i32
    %c0_i32_0 = arith.constant 0 : i32
    return %arg0, %c0_i32 : i32, i32
  }
}

</mosaic_0001>

<llo_original>
// kernel: forward.1
$region0: #{forward.1}
  #allocation0 [shape = 'u32[]', space=smem, size = 0x4, offset = 0x4, fixed_abs, tag = 'smem constant byte address 0x4 - core index']
  #allocation1 [shape = 'u32[144,128]{1,0:T(1,128)}', space=vmem, size = 0x12000, scoped, tag = 'internal scratch']
  %s0 = inlined_call_operand.vmem [shape: f32[16,128], index: 0, kind: input, shape index: {}]
  %s1 = inlined_call_operand.hbm [shape: f32[128,128], index: 1, kind: input, shape index: {}]
  %s2 = inlined_call_operand.vmem [shape: f32[1,128], index: 2, kind: input, shape index: {}]
  %s3 = inlined_call_operand.hbm [shape: f32[128,128], index: 3, kind: input, shape index: {}]
  %s4 = inlined_call_operand.vmem [shape: f32[1,128], index: 4, kind: input, shape index: {}]
  %s5 = inlined_call_operand.hbm [shape: f32[128,128], index: 5, kind: input, shape index: {}]
  %s6 = inlined_call_operand.vmem [shape: f32[1,128], index: 6, kind: input, shape index: {}]
  %s7 = inlined_call_operand.vmem [shape: f32[16,128], index: 7, kind: output, shape index: {}]
  %s8 = sld [smem:[#allocation0]]
  $region50: #{forward.1} parent=0
    _
  %s10 = ssub.s32 1, %s8
  %s11 = scalar_select 0, %s10, %s8
  $region1: #{forward.1} parent=0
    #allocation2 [shape = 'u8[65536]{0}', space=vmem, size = 0x10000, scoped, tag = 'input window, operand 1, single buffered']
    #allocation3 [shape = 's32[1]{0}', space=sflag, size = 0x4, scoped, tag = 'scoped memory for forward.1']
    #allocation4 [shape = 'u8[65536]{0}', space=vmem, size = 0x10000, scoped, tag = 'input window, operand 3, single buffered']
    #allocation5 [shape = 's32[1]{0}', space=sflag, size = 0x4, scoped, tag = 'scoped memory for forward.1']
    #allocation6 [shape = 'u8[65536]{0}', space=vmem, size = 0x10000, scoped, tag = 'input window, operand 5, single buffered']
    %12 = vsyncpa [#allocation3], 0
    %13 = vsyncpa [#allocation5], 0
    // Predicated region
    $region2: #{forward.1} parent=1 // pred_check
      _
    $region3: #{forward.1} parent=1 // pred_check_branch
      %15 = sbr.rel (0) target = $region5
    $region4: #{forward.1} parent=1 // pred_region
      _
    $region5: #{forward.1} parent=1 // pred_fallthru
      _
    // Predicated region
    $region6: #{forward.1} parent=1 // pred_check
      _
    $region7: #{forward.1} parent=1 // pred_check_branch
      %17 = sbr.rel (0) target = $region9
    $region8: #{forward.1} parent=1 // pred_region
      %s19 = ssub.s32 2048, 2048
      %20 = vsyncadd [#allocation3], %s19
      %s21 = sshll.u32 [#allocation2], 4
      %s22 = int_to_ptr.vmem [resolvable:$true] %s21
      %27 = dma.hbm_to_vmem [thread:$0]  %s1, 2048, %s22, [#allocation3], 128, 128, 8
    $region9: #{forward.1} parent=1 // pred_fallthru
      _
    // Predicated region
    $region10: #{forward.1} parent=1 // pred_check
      _
    $region11: #{forward.1} parent=1 // pred_check_branch
      %29 = sbr.rel (0) target = $region13
    $region12: #{forward.1} parent=1 // pred_region
      _
    $region13: #{forward.1} parent=1 // pred_fallthru
      _
    // Predicated region
    $region14: #{forward.1} parent=1 // pred_check
      _
    $region15: #{forward.1} parent=1 // pred_check_branch
      %31 = sbr.rel (0) target = $region17
    $region16: #{forward.1} parent=1 // pred_region
      %s33 = ssub.s32 2048, 2048
      %34 = vsyncadd [#allocation5], %s33
      %s35 = sshll.u32 [#allocation4], 4
      %s36 = int_to_ptr.vmem [resolvable:$true] %s35
      %41 = dma.hbm_to_vmem [thread:$0]  %s3, 2048, %s36, [#allocation5], 128, 128, 8
    $region17: #{forward.1} parent=1 // pred_fallthru
      _
    // Predicated region
    $region18: #{forward.1} parent=1 // pred_check
      _
    $region19: #{forward.1} parent=1 // pred_check_branch
      %43 = sbr.rel (0) target = $region21
    $region20: #{forward.1} parent=1 // pred_region
      _
    $region21: #{forward.1} parent=1 // pred_fallthru
      _
    // Predicated region
    $region22: #{forward.1} parent=1 // pred_check
      _
    $region23: #{forward.1} parent=1 // pred_check_branch
      %45 = sbr.rel (0) target = $region25
    $region24: #{forward.1} parent=1 // pred_region
      %s47 = ssub.s32 2048, 2048
      %48 = vsyncadd [#allocation5], %s47
      %s49 = sshll.u32 [#allocation6], 4
      %s50 = int_to_ptr.vmem [resolvable:$true] %s49
      %55 = dma.hbm_to_vmem [thread:$0]  %s5, 2048, %s50, [#allocation5], 128, 128, 8
    $region25: #{forward.1} parent=1 // pred_fallthru
      _
    // Predicated region
    $region26: #{forward.1} parent=1 // pred_check
      _
    $region27: #{forward.1} parent=1 // pred_check_branch
      %57 = sbr.rel (0) target = $region29
    $region28: #{forward.1} parent=1 // pred_region
      _
    $region29: #{forward.1} parent=1 // pred_fallthru
      _
    // Predicated region
    $region30: #{forward.1} parent=1 // pred_check
      _
    $region31: #{forward.1} parent=1 // pred_check_branch
      %59 = sbr.rel (0) target = $region33
    $region32: #{forward.1} parent=1 // pred_region
      %60 = dma.done [#allocation3], 2048
    $region33: #{forward.1} parent=1 // pred_fallthru
      _
    // Predicated region
    $region34: #{forward.1} parent=1 // pred_check
      _
    $region35: #{forward.1} parent=1 // pred_check_branch
      %62 = sbr.rel (0) target = $region37
    $region36: #{forward.1} parent=1 // pred_region
      %63 = dma.done [#allocation5], 2048
    $region37: #{forward.1} parent=1 // pred_fallthru
      _
    // Predicated region
    $region38: #{forward.1} parent=1 // pred_check
      _
    $region39: #{forward.1} parent=1 // pred_check_branch
      %65 = sbr.rel (0) target = $region41
    $region40: #{forward.1} parent=1 // pred_region
      %66 = dma.done [#allocation5], 2048
    $region41: #{forward.1} parent=1 // pred_fallthru
      _
    %v67 = vld [vmem:[%s0] sm:$0xff]
    %v68 = vld [vmem:[%s0 + $0x8] sm:$0xff]
    %v69 = vld [vmem:[#allocation2] sm:$0xff]
    %v70 = vld [vmem:[#allocation2 + $0x8] sm:$0xff]
    %v71 = vld [vmem:[#allocation2 + $0x10] sm:$0xff]
    %v72 = vld [vmem:[#allocation2 + $0x18] sm:$0xff]
    %v73 = vld [vmem:[#allocation2 + $0x20] sm:$0xff]
    %v74 = vld [vmem:[#allocation2 + $0x28] sm:$0xff]
    %v75 = vld [vmem:[#allocation2 + $0x30] sm:$0xff]
    %v76 = vld [vmem:[#allocation2 + $0x38] sm:$0xff]
    %v77 = vld [vmem:[#allocation2 + $0x40] sm:$0xff]
    %v78 = vld [vmem:[#allocation2 + $0x48] sm:$0xff]
    %v79 = vld [vmem:[#allocation2 + $0x50] sm:$0xff]
    %v80 = vld [vmem:[#allocation2 + $0x58] sm:$0xff]
    %v81 = vld [vmem:[#allocation2 + $0x60] sm:$0xff]
    %v82 = vld [vmem:[#allocation2 + $0x68] sm:$0xff]
    %v83 = vld [vmem:[#allocation2 + $0x70] sm:$0xff]
    %v84 = vld [vmem:[#allocation2 + $0x78] sm:$0xff]
    %v85 = vld [vmem:[%s2] sm:$0x1]
    %v87 = vlaneseq
    %v88 = vshrl.u32 %v87, 7
    %v89 = vsub.s32 0, %v88
    %v90 = vrot.slane %v85, %v89
    %92 = vmatprep.subr.mxu0 0.0
    %93 = vmatpush1.msra.mxu0 %v69
    %94 = vmatprep.subr.mxu0 0.0
    %95 = vmatpush1.msra.mxu0 %v70
    %96 = vmatprep.subr.mxu0 0.0
    %97 = vmatpush1.msra.mxu0 %v71
    %98 = vmatprep.subr.mxu0 0.0
    %99 = vmatpush1.msra.mxu0 %v72
    %100 = vmatprep.subr.mxu0 0.0
    %101 = vmatpush1.msra.mxu0 %v73
    %102 = vmatprep.subr.mxu0 0.0
    %103 = vmatpush1.msra.mxu0 %v74
    %104 = vmatprep.subr.mxu0 0.0
    %105 = vmatpush1.msra.mxu0 %v75
    %106 = vmatprep.subr.mxu0 0.0
    %107 = vmatpush1.msra.mxu0 %v76
    %108 = vmatprep.subr.mxu0 0.0
    %109 = vmatpush1.msra.mxu0 %v77
    %110 = vmatprep.subr.mxu0 0.0
    %111 = vmatpush1.msra.mxu0 %v78
    %112 = vmatprep.subr.mxu0 0.0
    %113 = vmatpush1.msra.mxu0 %v79
    %114 = vmatprep.subr.mxu0 0.0
    %115 = vmatpush1.msra.mxu0 %v80
    %116 = vmatprep.subr.mxu0 0.0
    %117 = vmatpush1.msra.mxu0 %v81
    %118 = vmatprep.subr.mxu0 0.0
    %119 = vmatpush1.msra.mxu0 %v82
    %120 = vmatprep.subr.mxu0 0.0
    %121 = vmatpush1.msra.mxu0 %v83
    %122 = vmatprep.subr.mxu0 0.0
    %123 = vmatpush1.msra.mxu0 %v84
    %124 = vmatprep.subr.mxu0 0.0
    %125 = vmatpush1.msra.mxu0 0.0
    %126 = vmatprep.subr.mxu0 0.0
    %127 = vmatpush1.msra.mxu0 0.0
    %128 = vmatprep.subr.mxu0 0.0
    %129 = vmatpush1.msra.mxu0 0.0
    %130 = vmatprep.subr.mxu0 0.0
    %131 = vmatpush1.msra.mxu0 0.0
    %132 = vmatprep.subr.mxu0 0.0
    %133 = vmatpush1.msra.mxu0 0.0
    %134 = vmatprep.subr.mxu0 0.0
    %135 = vmatpush1.msra.mxu0 0.0
    %136 = vmatprep.subr.mxu0 0.0
    %137 = vmatpush1.msra.mxu0 0.0
    %138 = vmatprep.subr.mxu0 0.0
    %139 = vmatpush1.msra.mxu0 0.0
    %140 = vmatprep.subr.mxu0 0.0
    %141 = vmatpush1.msra.mxu0 0.0
    %142 = vmatprep.subr.mxu0 0.0
    %143 = vmatpush1.msra.mxu0 0.0
    %144 = vmatprep.subr.mxu0 0.0
    %145 = vmatpush1.msra.mxu0 0.0
    %146 = vmatprep.subr.mxu0 0.0
    %147 = vmatpush1.msra.mxu0 0.0
    %148 = vmatprep.subr.mxu0 0.0
    %149 = vmatpush1.msra.mxu0 0.0
    %150 = vmatprep.subr.mxu0 0.0
    %151 = vmatpush1.msra.mxu0 0.0
    %152 = vmatprep.subr.mxu0 0.0
    %153 = vmatpush1.msra.mxu0 0.0
    %154 = vmatprep.subr.mxu0 0.0
    %155 = vmatpush1.msra.mxu0 0.0
    %156 = vmatprep.mubr.f32.mxu0 0.0
    %157 = vmatmul.mubr.f32.gmra.mrb[0].mxu0 %v67
    %v158 = vpop.f32.mrb[0].mxu0
    %v159 = vadd.f32 %v90, %v158
    %v160 = vpop.f32.mrb[0].mxu0
    %161 = vmatprep.mubr.f32.mxu0 0.0
    %162 = vmatmul.mubr.f32.gmra.mrb[0].mxu0 %v68
    %v163 = vpop.f32.mrb[0].mxu0
    %v164 = vadd.f32 %v90, %v163
    %v165 = vpop.f32.mrb[0].mxu0
    %166 = vdwg.mxu0
    %v167 = vmax.f32 %v159, 0.0
    %v168 = vmax.f32 %v164, 0.0
    %v169 = vld [vmem:[#allocation4] sm:$0xff]
    %v170 = vld [vmem:[#allocation4 + $0x8] sm:$0xff]
    %v171 = vld [vmem:[#allocation4 + $0x10] sm:$0xff]
    %v172 = vld [vmem:[#allocation4 + $0x18] sm:$0xff]
    %v173 = vld [vmem:[#allocation4 + $0x20] sm:$0xff]
    %v174 = vld [vmem:[#allocation4 + $0x28] sm:$0xff]
    %v175 = vld [vmem:[#allocation4 + $0x30] sm:$0xff]
    %v176 = vld [vmem:[#allocation4 + $0x38] sm:$0xff]
    %v177 = vld [vmem:[#allocation4 + $0x40] sm:$0xff]
    %v178 = vld [vmem:[#allocation4 + $0x48] sm:$0xff]
    %v179 = vld [vmem:[#allocation4 + $0x50] sm:$0xff]
    %v180 = vld [vmem:[#allocation4 + $0x58] sm:$0xff]
    %v181 = vld [vmem:[#allocation4 + $0x60] sm:$0xff]
    %v182 = vld [vmem:[#allocation4 + $0x68] sm:$0xff]
    %v183 = vld [vmem:[#allocation4 + $0x70] sm:$0xff]
    %v184 = vld [vmem:[#allocation4 + $0x78] sm:$0xff]
    %v185 = vld [vmem:[%s4] sm:$0x1]
    %v187 = vlaneseq
    %v188 = vshrl.u32 %v187, 7
    %v189 = vsub.s32 0, %v188
    %v190 = vrot.slane %v185, %v189
    %192 = vmatprep.subr.mxu0 0.0
    %193 = vmatpush1.msra.mxu0 %v169
    %194 = vmatprep.subr.mxu0 0.0
    %195 = vmatpush1.msra.mxu0 %v170
    %196 = vmatprep.subr.mxu0 0.0
    %197 = vmatpush1.msra.mxu0 %v171
    %198 = vmatprep.subr.mxu0 0.0
    %199 = vmatpush1.msra.mxu0 %v172
    %200 = vmatprep.subr.mxu0 0.0
    %201 = vmatpush1.msra.mxu0 %v173
    %202 = vmatprep.subr.mxu0 0.0
    %203 = vmatpush1.msra.mxu0 %v174
    %204 = vmatprep.subr.mxu0 0.0
    %205 = vmatpush1.msra.mxu0 %v175
    %206 = vmatprep.subr.mxu0 0.0
    %207 = vmatpush1.msra.mxu0 %v176
    %208 = vmatprep.subr.mxu0 0.0
    %209 = vmatpush1.msra.mxu0 %v177
    %210 = vmatprep.subr.mxu0 0.0
    %211 = vmatpush1.msra.mxu0 %v178
    %212 = vmatprep.subr.mxu0 0.0
    %213 = vmatpush1.msra.mxu0 %v179
    %214 = vmatprep.subr.mxu0 0.0
    %215 = vmatpush1.msra.mxu0 %v180
    %216 = vmatprep.subr.mxu0 0.0
    %217 = vmatpush1.msra.mxu0 %v181
    %218 = vmatprep.subr.mxu0 0.0
    %219 = vmatpush1.msra.mxu0 %v182
    %220 = vmatprep.subr.mxu0 0.0
    %221 = vmatpush1.msra.mxu0 %v183
    %222 = vmatprep.subr.mxu0 0.0
    %223 = vmatpush1.msra.mxu0 %v184
    %224 = vmatprep.subr.mxu0 0.0
    %225 = vmatpush1.msra.mxu0 0.0
    %226 = vmatprep.subr.mxu0 0.0
    %227 = vmatpush1.msra.mxu0 0.0
    %228 = vmatprep.subr.mxu0 0.0
    %229 = vmatpush1.msra.mxu0 0.0
    %230 = vmatprep.subr.mxu0 0.0
    %231 = vmatpush1.msra.mxu0 0.0
    %232 = vmatprep.subr.mxu0 0.0
    %233 = vmatpush1.msra.mxu0 0.0
    %234 = vmatprep.subr.mxu0 0.0
    %235 = vmatpush1.msra.mxu0 0.0
    %236 = vmatprep.subr.mxu0 0.0
    %237 = vmatpush1.msra.mxu0 0.0
    %238 = vmatprep.subr.mxu0 0.0
    %239 = vmatpush1.msra.mxu0 0.0
    %240 = vmatprep.subr.mxu0 0.0
    %241 = vmatpush1.msra.mxu0 0.0
    %242 = vmatprep.subr.mxu0 0.0
    %243 = vmatpush1.msra.mxu0 0.0
    %244 = vmatprep.subr.mxu0 0.0
    %245 = vmatpush1.msra.mxu0 0.0
    %246 = vmatprep.subr.mxu0 0.0
    %247 = vmatpush1.msra.mxu0 0.0
    %248 = vmatprep.subr.mxu0 0.0
    %249 = vmatpush1.msra.mxu0 0.0
    %250 = vmatprep.subr.mxu0 0.0
    %251 = vmatpush1.msra.mxu0 0.0
    %252 = vmatprep.subr.mxu0 0.0
    %253 = vmatpush1.msra.mxu0 0.0
    %254 = vmatprep.subr.mxu0 0.0
    %255 = vmatpush1.msra.mxu0 0.0
    %256 = vmatprep.mubr.f32.mxu0 0.0
    %257 = vmatmul.mubr.f32.gmra.mrb[0].mxu0 %v167
    %v258 = vpop.f32.mrb[0].mxu0
    %v259 = vadd.f32 %v190, %v258
    %v260 = vpop.f32.mrb[0].mxu0
    %261 = vmatprep.mubr.f32.mxu0 0.0
    %262 = vmatmul.mubr.f32.gmra.mrb[0].mxu0 %v168
    %v263 = vpop.f32.mrb[0].mxu0
    %v264 = vadd.f32 %v190, %v263
    %v265 = vpop.f32.mrb[0].mxu0
    %266 = vdwg.mxu0
    %v267 = vmax.f32 %v259, 0.0
    %v268 = vmax.f32 %v264, 0.0
    %v269 = vld [vmem:[#allocation6] sm:$0xff]
    %v270 = vld [vmem:[#allocation6 + $0x8] sm:$0xff]
    %v271 = vld [vmem:[#allocation6 + $0x10] sm:$0xff]
    %v272 = vld [vmem:[#allocation6 + $0x18] sm:$0xff]
    %v273 = vld [vmem:[#allocation6 + $0x20] sm:$0xff]
    %v274 = vld [vmem:[#allocation6 + $0x28] sm:$0xff]
    %v275 = vld [vmem:[#allocation6 + $0x30] sm:$0xff]
    %v276 = vld [vmem:[#allocation6 + $0x38] sm:$0xff]
    %v277 = vld [vmem:[#allocation6 + $0x40] sm:$0xff]
    %v278 = vld [vmem:[#allocation6 + $0x48] sm:$0xff]
    %v279 = vld [vmem:[#allocation6 + $0x50] sm:$0xff]
    %v280 = vld [vmem:[#allocation6 + $0x58] sm:$0xff]
    %v281 = vld [vmem:[#allocation6 + $0x60] sm:$0xff]
    %v282 = vld [vmem:[#allocation6 + $0x68] sm:$0xff]
    %v283 = vld [vmem:[#allocation6 + $0x70] sm:$0xff]
    %v284 = vld [vmem:[#allocation6 + $0x78] sm:$0xff]
    %v285 = vld [vmem:[%s6] sm:$0x1]
    %v287 = vlaneseq
    %v288 = vshrl.u32 %v287, 7
    %v289 = vsub.s32 0, %v288
    %v290 = vrot.slane %v285, %v289
    %292 = vmatprep.subr.mxu0 0.0
    %293 = vmatpush1.msra.mxu0 %v269
    %294 = vmatprep.subr.mxu0 0.0
    %295 = vmatpush1.msra.mxu0 %v270
    %296 = vmatprep.subr.mxu0 0.0
    %297 = vmatpush1.msra.mxu0 %v271
    %298 = vmatprep.subr.mxu0 0.0
    %299 = vmatpush1.msra.mxu0 %v272
    %300 = vmatprep.subr.mxu0 0.0
    %301 = vmatpush1.msra.mxu0 %v273
    %302 = vmatprep.subr.mxu0 0.0
    %303 = vmatpush1.msra.mxu0 %v274
    %304 = vmatprep.subr.mxu0 0.0
    %305 = vmatpush1.msra.mxu0 %v275
    %306 = vmatprep.subr.mxu0 0.0
    %307 = vmatpush1.msra.mxu0 %v276
    %308 = vmatprep.subr.mxu0 0.0
    %309 = vmatpush1.msra.mxu0 %v277
    %310 = vmatprep.subr.mxu0 0.0
    %311 = vmatpush1.msra.mxu0 %v278
    %312 = vmatprep.subr.mxu0 0.0
    %313 = vmatpush1.msra.mxu0 %v279
    %314 = vmatprep.subr.mxu0 0.0
    %315 = vmatpush1.msra.mxu0 %v280
    %316 = vmatprep.subr.mxu0 0.0
    %317 = vmatpush1.msra.mxu0 %v281
    %318 = vmatprep.subr.mxu0 0.0
    %319 = vmatpush1.msra.mxu0 %v282
    %320 = vmatprep.subr.mxu0 0.0
    %321 = vmatpush1.msra.mxu0 %v283
    %322 = vmatprep.subr.mxu0 0.0
    %323 = vmatpush1.msra.mxu0 %v284
    %324 = vmatprep.subr.mxu0 0.0
    %325 = vmatpush1.msra.mxu0 0.0
    %326 = vmatprep.subr.mxu0 0.0
    %327 = vmatpush1.msra.mxu0 0.0
    %328 = vmatprep.subr.mxu0 0.0
    %329 = vmatpush1.msra.mxu0 0.0
    %330 = vmatprep.subr.mxu0 0.0
    %331 = vmatpush1.msra.mxu0 0.0
    %332 = vmatprep.subr.mxu0 0.0
    %333 = vmatpush1.msra.mxu0 0.0
    %334 = vmatprep.subr.mxu0 0.0
    %335 = vmatpush1.msra.mxu0 0.0
    %336 = vmatprep.subr.mxu0 0.0
    %337 = vmatpush1.msra.mxu0 0.0
    %338 = vmatprep.subr.mxu0 0.0
    %339 = vmatpush1.msra.mxu0 0.0
    %340 = vmatprep.subr.mxu0 0.0
    %341 = vmatpush1.msra.mxu0 0.0
    %342 = vmatprep.subr.mxu0 0.0
    %343 = vmatpush1.msra.mxu0 0.0
    %344 = vmatprep.subr.mxu0 0.0
    %345 = vmatpush1.msra.mxu0 0.0
    %346 = vmatprep.subr.mxu0 0.0
    %347 = vmatpush1.msra.mxu0 0.0
    %348 = vmatprep.subr.mxu0 0.0
    %349 = vmatpush1.msra.mxu0 0.0
    %350 = vmatprep.subr.mxu0 0.0
    %351 = vmatpush1.msra.mxu0 0.0
    %352 = vmatprep.subr.mxu0 0.0
    %353 = vmatpush1.msra.mxu0 0.0
    %354 = vmatprep.subr.mxu0 0.0
    %355 = vmatpush1.msra.mxu0 0.0
    %356 = vmatprep.mubr.f32.mxu0 0.0
    %357 = vmatmul.mubr.f32.gmra.mrb[0].mxu0 %v267
    %v358 = vpop.f32.mrb[0].mxu0
    %v359 = vadd.f32 %v290, %v358
    %v360 = vpop.f32.mrb[0].mxu0
    %361 = vmatprep.mubr.f32.mxu0 0.0
    %362 = vmatmul.mubr.f32.gmra.mrb[0].mxu0 %v268
    %v363 = vpop.f32.mrb[0].mxu0
    %v364 = vadd.f32 %v290, %v363
    %v365 = vpop.f32.mrb[0].mxu0
    %366 = vdwg.mxu0
    %367 = vst [vmem:[%s7] sm:$0xff] %v359
    %368 = vst [vmem:[%s7 + $0x8] sm:$0xff] %v364
    // Predicated region
    $region42: #{forward.1} parent=1 // pred_check
      _
    $region43: #{forward.1} parent=1 // pred_check_branch
      %370 = sbr.rel (0) target = $region45
    $region44: #{forward.1} parent=1 // pred_region
      _
    $region45: #{forward.1} parent=1 // pred_fallthru
      _
    // Predicated region
    $region46: #{forward.1} parent=1 // pred_check
      _
    $region47: #{forward.1} parent=1 // pred_check_branch
      %372 = sbr.rel (0) target = $region49
    $region48: #{forward.1} parent=1 // pred_region
      _
    $region49: #{forward.1} parent=1 // pred_fallthru
      _
    %373 = vsyncpa [#allocation3], 1
    %374 = vsyncpa [#allocation5], 1

// kernel: forward.1
$region0: #{forward.1}
  #allocation0 [shape = 'u32[]', space=smem, size = 0x4, offset = 0x4, fixed_abs, tag = 'smem constant byte address 0x4 - core index']
  #allocation1 [shape = 'u32[144,128]{1,0:T(1,128)}', space=vmem, size = 0x12000, scoped, tag = 'internal scratch']
  %s0 = inlined_call_operand.vmem [shape: f32[16,128], index: 0, kind: input, shape index: {}]
  %s1 = inlined_call_operand.hbm [shape: f32[128,128], index: 1, kind: input, shape index: {}]
  %s2 = inlined_call_operand.vmem [shape: f32[1,128], index: 2, kind: input, shape index: {}]
  %s3 = inlined_call_operand.hbm [shape: f32[128,128], index: 3, kind: input, shape index: {}]
  %s4 = inlined_call_operand.vmem [shape: f32[1,128], index: 4, kind: input, shape index: {}]
  %s5 = inlined_call_operand.hbm [shape: f32[128,128], index: 5, kind: input, shape index: {}]
  %s6 = inlined_call_operand.vmem [shape: f32[1,128], index: 6, kind: input, shape index: {}]
  %s7 = inlined_call_operand.vmem [shape: f32[16,128], index: 7, kind: output, shape index: {}]
  %s8 = sld [smem:[#allocation0]]
  $region50: #{forward.1} parent=0
    _
  %s10 = ssub.s32 1, %s8
  %s11 = scalar_select 0, %s10, %s8
  $region1: #{forward.1} parent=0
    #allocation2 [shape = 'u8[65536]{0}', space=vmem, size = 0x10000, scoped, tag = 'input window, operand 1, single buffered']
    #allocation3 [shape = 's32[1]{0}', space=sflag, size = 0x4, scoped, tag = 'scoped memory for forward.1']
    #allocation4 [shape = 'u8[65536]{0}', space=vmem, size = 0x10000, scoped, tag = 'input window, operand 3, single buffered']
    #allocation5 [shape = 's32[1]{0}', space=sflag, size = 0x4, scoped, tag = 'scoped memory for forward.1']
    #allocation6 [shape = 'u8[65536]{0}', space=vmem, size = 0x10000, scoped, tag = 'input window, operand 5, single buffered']
    %12 = vsyncpa [#allocation3], 0
    %13 = vsyncpa [#allocation5], 0
    // Predicated region
    $region2: #{forward.1} parent=1 // pred_check
      _
    $region3: #{forward.1} parent=1 // pred_check_branch
      %15 = sbr.rel (0) target = $region5
    $region4: #{forward.1} parent=1 // pred_region
      _
    $region5: #{forward.1} parent=1 // pred_fallthru
      _
    // Predicated region
    $region6: #{forward.1} parent=1 // pred_check
      _
    $region7: #{forward.1} parent=1 // pred_check_branch
      %17 = sbr.rel (0) target = $region9
    $region8: #{forward.1} parent=1 // pred_region
      %s19 = ssub.s32 2048, 2048
      %20 = vsyncadd [#allocation3], %s19
      %s21 = sshll.u32 [#allocation2], 4
      %s22 = int_to_ptr.vmem [resolvable:$true] %s21
      %27 = dma.hbm_to_vmem [thread:$0]  %s1, 2048, %s22, [#allocation3], 128, 128, 8
    $region9: #{forward.1} parent=1 // pred_fallthru
      _
    // Predicated region
    $region10: #{forward.1} parent=1 // pred_check
      _
    $region11: #{forward.1} parent=1 // pred_check_branch
      %29 = sbr.rel (0) target = $region13
    $region12: #{forward.1} parent=1 // pred_region
      _
    $region13: #{forward.1} parent=1 // pred_fallthru
      _
    // Predicated region
    $region14: #{forward.1} parent=1 // pred_check
      _
    $region15: #{forward.1} parent=1 // pred_check_branch
      %31 = sbr.rel (0) target = $region17
    $region16: #{forward.1} parent=1 // pred_region
      %s33 = ssub.s32 2048, 2048
      %34 = vsyncadd [#allocation5], %s33
      %s35 = sshll.u32 [#allocation4], 4
      %s36 = int_to_ptr.vmem [resolvable:$true] %s35
      %41 = dma.hbm_to_vmem [thread:$0]  %s3, 2048, %s36, [#allocation5], 128, 128, 8
    $region17: #{forward.1} parent=1 // pred_fallthru
      _
    // Predicated region
    $region18: #{forward.1} parent=1 // pred_check
      _
    $region19: #{forward.1} parent=1 // pred_check_branch
      %43 = sbr.rel (0) target = $region21
    $region20: #{forward.1} parent=1 // pred_region
      _
    $region21: #{forward.1} parent=1 // pred_fallthru
      _
    // Predicated region
    $region22: #{forward.1} parent=1 // pred_check
      _
    $region23: #{forward.1} parent=1 // pred_check_branch
      %45 = sbr.rel (0) target = $region25
    $region24: #{forward.1} parent=1 // pred_region
      %s47 = ssub.s32 2048, 2048
      %48 = vsyncadd [#allocation5], %s47
      %s49 = sshll.u32 [#allocation6], 4
      %s50 = int_to_ptr.vmem [resolvable:$true] %s49
      %55 = dma.hbm_to_vmem [thread:$0]  %s5, 2048, %s50, [#allocation5], 128, 128, 8
    $region25: #{forward.1} parent=1 // pred_fallthru
      _
    // Predicated region
    $region26: #{forward.1} parent=1 // pred_check
      _
    $region27: #{forward.1} parent=1 // pred_check_branch
      %57 = sbr.rel (0) target = $region29
    $region28: #{forward.1} parent=1 // pred_region
      _
    $region29: #{forward.1} parent=1 // pred_fallthru
      _
    // Predicated region
    $region30: #{forward.1} parent=1 // pred_check
      _
    $region31: #{forward.1} parent=1 // pred_check_branch
      %59 = sbr.rel (0) target = $region33
    $region32: #{forward.1} parent=1 // pred_region
      %60 = dma.done [#allocation3], 2048
    $region33: #{forward.1} parent=1 // pred_fallthru
      _
    // Predicated region
    $region34: #{forward.1} parent=1 // pred_check
      _
    $region35: #{forward.1} parent=1 // pred_check_branch
      %62 = sbr.rel (0) target = $region37
    $region36: #{forward.1} parent=1 // pred_region
      %63 = dma.done [#allocation5], 2048
    $region37: #{forward.1} parent=1 // pred_fallthru
      _
    // Predicated region
    $region38: #{forward.1} parent=1 // pred_check
      _
    $region39: #{forward.1} parent=1 // pred_check_branch
      %65 = sbr.rel (0) target = $region41
    $region40: #{forward.1} parent=1 // pred_region
      %66 = dma.done [#allocation5], 2048
    $region41: #{forward.1} parent=1 // pred_fallthru
      _
    %v67 = vld [vmem:[%s0] sm:$0xff]
    %v68 = vld [vmem:[%s0 + $0x8] sm:$0xff]
    %v69 = vld [vmem:[#allocation2] sm:$0xff]
    %v70 = vld [vmem:[#allocation2 + $0x8] sm:$0xff]
    %v71 = vld [vmem:[#allocation2 + $0x10] sm:$0xff]
    %v72 = vld [vmem:[#allocation2 + $0x18] sm:$0xff]
    %v73 = vld [vmem:[#allocation2 + $0x20] sm:$0xff]
    %v74 = vld [vmem:[#allocation2 + $0x28] sm:$0xff]
    %v75 = vld [vmem:[#allocation2 + $0x30] sm:$0xff]
    %v76 = vld [vmem:[#allocation2 + $0x38] sm:$0xff]
    %v77 = vld [vmem:[#allocation2 + $0x40] sm:$0xff]
    %v78 = vld [vmem:[#allocation2 + $0x48] sm:$0xff]
    %v79 = vld [vmem:[#allocation2 + $0x50] sm:$0xff]
    %v80 = vld [vmem:[#allocation2 + $0x58] sm:$0xff]
    %v81 = vld [vmem:[#allocation2 + $0x60] sm:$0xff]
    %v82 = vld [vmem:[#allocation2 + $0x68] sm:$0xff]
    %v83 = vld [vmem:[#allocation2 + $0x70] sm:$0xff]
    %v84 = vld [vmem:[#allocation2 + $0x78] sm:$0xff]
    %v85 = vld [vmem:[%s2] sm:$0x1]
    %v87 = vlaneseq
    %v88 = vshrl.u32 %v87, 7
    %v89 = vsub.s32 0, %v88
    %v90 = vrot.slane %v85, %v89
    %92 = vmatprep.subr.mxu0 0.0
    %93 = vmatpush1.msra.mxu0 %v69
    %94 = vmatprep.subr.mxu0 0.0
    %95 = vmatpush1.msra.mxu0 %v70
    %96 = vmatprep.subr.mxu0 0.0
    %97 = vmatpush1.msra.mxu0 %v71
    %98 = vmatprep.subr.mxu0 0.0
    %99 = vmatpush1.msra.mxu0 %v72
    %100 = vmatprep.subr.mxu0 0.0
    %101 = vmatpush1.msra.mxu0 %v73
    %102 = vmatprep.subr.mxu0 0.0
    %103 = vmatpush1.msra.mxu0 %v74
    %104 = vmatprep.subr.mxu0 0.0
    %105 = vmatpush1.msra.mxu0 %v75
    %106 = vmatprep.subr.mxu0 0.0
    %107 = vmatpush1.msra.mxu0 %v76
    %108 = vmatprep.subr.mxu0 0.0
    %109 = vmatpush1.msra.mxu0 %v77
    %110 = vmatprep.subr.mxu0 0.0
    %111 = vmatpush1.msra.mxu0 %v78
    %112 = vmatprep.subr.mxu0 0.0
    %113 = vmatpush1.msra.mxu0 %v79
    %114 = vmatprep.subr.mxu0 0.0
    %115 = vmatpush1.msra.mxu0 %v80
    %116 = vmatprep.subr.mxu0 0.0
    %117 = vmatpush1.msra.mxu0 %v81
    %118 = vmatprep.subr.mxu0 0.0
    %119 = vmatpush1.msra.mxu0 %v82
    %120 = vmatprep.subr.mxu0 0.0
    %121 = vmatpush1.msra.mxu0 %v83
    %122 = vmatprep.subr.mxu0 0.0
    %123 = vmatpush1.msra.mxu0 %v84
    %124 = vmatprep.subr.mxu0 0.0
    %125 = vmatpush1.msra.mxu0 0.0
    %126 = vmatprep.subr.mxu0 0.0
    %127 = vmatpush1.msra.mxu0 0.0
    %128 = vmatprep.subr.mxu0 0.0
    %129 = vmatpush1.msra.mxu0 0.0
    %130 = vmatprep.subr.mxu0 0.0
    %131 = vmatpush1.msra.mxu0 0.0
    %132 = vmatprep.subr.mxu0 0.0
    %133 = vmatpush1.msra.mxu0 0.0
    %134 = vmatprep.subr.mxu0 0.0
    %135 = vmatpush1.msra.mxu0 0.0
    %136 = vmatprep.subr.mxu0 0.0
    %137 = vmatpush1.msra.mxu0 0.0
    %138 = vmatprep.subr.mxu0 0.0
    %139 = vmatpush1.msra.mxu0 0.0
    %140 = vmatprep.subr.mxu0 0.0
    %141 = vmatpush1.msra.mxu0 0.0
    %142 = vmatprep.subr.mxu0 0.0
    %143 = vmatpush1.msra.mxu0 0.0
    %144 = vmatprep.subr.mxu0 0.0
    %145 = vmatpush1.msra.mxu0 0.0
    %146 = vmatprep.subr.mxu0 0.0
    %147 = vmatpush1.msra.mxu0 0.0
    %148 = vmatprep.subr.mxu0 0.0
    %149 = vmatpush1.msra.mxu0 0.0
    %150 = vmatprep.subr.mxu0 0.0
    %151 = vmatpush1.msra.mxu0 0.0
    %152 = vmatprep.subr.mxu0 0.0
    %153 = vmatpush1.msra.mxu0 0.0
    %154 = vmatprep.subr.mxu0 0.0
    %155 = vmatpush1.msra.mxu0 0.0
    %156 = vmatprep.mubr.f32.mxu0 0.0
    %157 = vmatmul.mubr.f32.gmra.mrb[0].mxu0 %v67
    %v158 = vpop.f32.mrb[0].mxu0
    %v159 = vadd.f32 %v90, %v158
    %v160 = vpop.f32.mrb[0].mxu0
    %161 = vmatprep.mubr.f32.mxu0 0.0
    %162 = vmatmul.mubr.f32.gmra.mrb[0].mxu0 %v68
    %v163 = vpop.f32.mrb[0].mxu0
    %v164 = vadd.f32 %v90, %v163
    %v165 = vpop.f32.mrb[0].mxu0
    %166 = vdwg.mxu0
    %v167 = vmax.f32 %v159, 0.0
    %v168 = vmax.f32 %v164, 0.0
    %v169 = vld [vmem:[#allocation4] sm:$0xff]
    %v170 = vld [vmem:[#allocation4 + $0x8] sm:$0xff]
    %v171 = vld [vmem:[#allocation4 + $0x10] sm:$0xff]
    %v172 = vld [vmem:[#allocation4 + $0x18] sm:$0xff]
    %v173 = vld [vmem:[#allocation4 + $0x20] sm:$0xff]
    %v174 = vld [vmem:[#allocation4 + $0x28] sm:$0xff]
    %v175 = vld [vmem:[#allocation4 + $0x30] sm:$0xff]
    %v176 = vld [vmem:[#allocation4 + $0x38] sm:$0xff]
    %v177 = vld [vmem:[#allocation4 + $0x40] sm:$0xff]
    %v178 = vld [vmem:[#allocation4 + $0x48] sm:$0xff]
    %v179 = vld [vmem:[#allocation4 + $0x50] sm:$0xff]
    %v180 = vld [vmem:[#allocation4 + $0x58] sm:$0xff]
    %v181 = vld [vmem:[#allocation4 + $0x60] sm:$0xff]
    %v182 = vld [vmem:[#allocation4 + $0x68] sm:$0xff]
    %v183 = vld [vmem:[#allocation4 + $0x70] sm:$0xff]
    %v184 = vld [vmem:[#allocation4 + $0x78] sm:$0xff]
    %v185 = vld [vmem:[%s4] sm:$0x1]
    %v187 = vlaneseq
    %v188 = vshrl.u32 %v187, 7
    %v189 = vsub.s32 0, %v188
    %v190 = vrot.slane %v185, %v189
    %192 = vmatprep.subr.mxu0 0.0
    %193 = vmatpush1.msra.mxu0 %v169
    %194 = vmatprep.subr.mxu0 0.0
    %195 = vmatpush1.msra.mxu0 %v170
    %196 = vmatprep.subr.mxu0 0.0
    %197 = vmatpush1.msra.mxu0 %v171
    %198 = vmatprep.subr.mxu0 0.0
    %199 = vmatpush1.msra.mxu0 %v172
    %200 = vmatprep.subr.mxu0 0.0
    %201 = vmatpush1.msra.mxu0 %v173
    %202 = vmatprep.subr.mxu0 0.0
    %203 = vmatpush1.msra.mxu0 %v174
    %204 = vmatprep.subr.mxu0 0.0
    %205 = vmatpush1.msra.mxu0 %v175
    %206 = vmatprep.subr.mxu0 0.0
    %207 = vmatpush1.msra.mxu0 %v176
    %208 = vmatprep.subr.mxu0 0.0
    %209 = vmatpush1.msra.mxu0 %v177
    %210 = vmatprep.subr.mxu0 0.0
    %211 = vmatpush1.msra.mxu0 %v178
    %212 = vmatprep.subr.mxu0 0.0
    %213 = vmatpush1.msra.mxu0 %v179
    %214 = vmatprep.subr.mxu0 0.0
    %215 = vmatpush1.msra.mxu0 %v180
    %216 = vmatprep.subr.mxu0 0.0
    %217 = vmatpush1.msra.mxu0 %v181
    %218 = vmatprep.subr.mxu0 0.0
    %219 = vmatpush1.msra.mxu0 %v182
    %220 = vmatprep.subr.mxu0 0.0
    %221 = vmatpush1.msra.mxu0 %v183
    %222 = vmatprep.subr.mxu0 0.0
    %223 = vmatpush1.msra.mxu0 %v184
    %224 = vmatprep.subr.mxu0 0.0
    %225 = vmatpush1.msra.mxu0 0.0
    %226 = vmatprep.subr.mxu0 0.0
    %227 = vmatpush1.msra.mxu0 0.0
    %228 = vmatprep.subr.mxu0 0.0
    %229 = vmatpush1.msra.mxu0 0.0
    %230 = vmatprep.subr.mxu0 0.0
    %231 = vmatpush1.msra.mxu0 0.0
    %232 = vmatprep.subr.mxu0 0.0
    %233 = vmatpush1.msra.mxu0 0.0
    %234 = vmatprep.subr.mxu0 0.0
    %235 = vmatpush1.msra.mxu0 0.0
    %236 = vmatprep.subr.mxu0 0.0
    %237 = vmatpush1.msra.mxu0 0.0
    %238 = vmatprep.subr.mxu0 0.0
    %239 = vmatpush1.msra.mxu0 0.0
    %240 = vmatprep.subr.mxu0 0.0
    %241 = vmatpush1.msra.mxu0 0.0
    %242 = vmatprep.subr.mxu0 0.0
    %243 = vmatpush1.msra.mxu0 0.0
    %244 = vmatprep.subr.mxu0 0.0
    %245 = vmatpush1.msra.mxu0 0.0
    %246 = vmatprep.subr.mxu0 0.0
    %247 = vmatpush1.msra.mxu0 0.0
    %248 = vmatprep.subr.mxu0 0.0
    %249 = vmatpush1.msra.mxu0 0.0
    %250 = vmatprep.subr.mxu0 0.0
    %251 = vmatpush1.msra.mxu0 0.0
    %252 = vmatprep.subr.mxu0 0.0
    %253 = vmatpush1.msra.mxu0 0.0
    %254 = vmatprep.subr.mxu0 0.0
    %255 = vmatpush1.msra.mxu0 0.0
    %256 = vmatprep.mubr.f32.mxu0 0.0
    %257 = vmatmul.mubr.f32.gmra.mrb[0].mxu0 %v167
    %v258 = vpop.f32.mrb[0].mxu0
    %v259 = vadd.f32 %v190, %v258
    %v260 = vpop.f32.mrb[0].mxu0
    %261 = vmatprep.mubr.f32.mxu0 0.0
    %262 = vmatmul.mubr.f32.gmra.mrb[0].mxu0 %v168
    %v263 = vpop.f32.mrb[0].mxu0
    %v264 = vadd.f32 %v190, %v263
    %v265 = vpop.f32.mrb[0].mxu0
    %266 = vdwg.mxu0
    %v267 = vmax.f32 %v259, 0.0
    %v268 = vmax.f32 %v264, 0.0
    %v269 = vld [vmem:[#allocation6] sm:$0xff]
    %v270 = vld [vmem:[#allocation6 + $0x8] sm:$0xff]
    %v271 = vld [vmem:[#allocation6 + $0x10] sm:$0xff]
    %v272 = vld [vmem:[#allocation6 + $0x18] sm:$0xff]
    %v273 = vld [vmem:[#allocation6 + $0x20] sm:$0xff]
    %v274 = vld [vmem:[#allocation6 + $0x28] sm:$0xff]
    %v275 = vld [vmem:[#allocation6 + $0x30] sm:$0xff]
    %v276 = vld [vmem:[#allocation6 + $0x38] sm:$0xff]
    %v277 = vld [vmem:[#allocation6 + $0x40] sm:$0xff]
    %v278 = vld [vmem:[#allocation6 + $0x48] sm:$0xff]
    %v279 = vld [vmem:[#allocation6 + $0x50] sm:$0xff]
    %v280 = vld [vmem:[#allocation6 + $0x58] sm:$0xff]
    %v281 = vld [vmem:[#allocation6 + $0x60] sm:$0xff]
    %v282 = vld [vmem:[#allocation6 + $0x68] sm:$0xff]
    %v283 = vld [vmem:[#allocation6 + $0x70] sm:$0xff]
    %v284 = vld [vmem:[#allocation6 + $0x78] sm:$0xff]
    %v285 = vld [vmem:[%s6] sm:$0x1]
    %v287 = vlaneseq
    %v288 = vshrl.u32 %v287, 7
    %v289 = vsub.s32 0, %v288
    %v290 = vrot.slane %v285, %v289
    %292 = vmatprep.subr.mxu0 0.0
    %293 = vmatpush1.msra.mxu0 %v269
    %294 = vmatprep.subr.mxu0 0.0
    %295 = vmatpush1.msra.mxu0 %v270
    %296 = vmatprep.subr.mxu0 0.0
    %297 = vmatpush1.msra.mxu0 %v271
    %298 = vmatprep.subr.mxu0 0.0
    %299 = vmatpush1.msra.mxu0 %v272
    %300 = vmatprep.subr.mxu0 0.0
    %301 = vmatpush1.msra.mxu0 %v273
    %302 = vmatprep.subr.mxu0 0.0
    %303 = vmatpush1.msra.mxu0 %v274
    %304 = vmatprep.subr.mxu0 0.0
    %305 = vmatpush1.msra.mxu0 %v275
    %306 = vmatprep.subr.mxu0 0.0
    %307 = vmatpush1.msra.mxu0 %v276
    %308 = vmatprep.subr.mxu0 0.0
    %309 = vmatpush1.msra.mxu0 %v277
    %310 = vmatprep.subr.mxu0 0.0
    %311 = vmatpush1.msra.mxu0 %v278
    %312 = vmatprep.subr.mxu0 0.0
    %313 = vmatpush1.msra.mxu0 %v279
    %314 = vmatprep.subr.mxu0 0.0
    %315 = vmatpush1.msra.mxu0 %v280
    %316 = vmatprep.subr.mxu0 0.0
    %317 = vmatpush1.msra.mxu0 %v281
    %318 = vmatprep.subr.mxu0 0.0
    %319 = vmatpush1.msra.mxu0 %v282
    %320 = vmatprep.subr.mxu0 0.0
    %321 = vmatpush1.msra.mxu0 %v283
    %322 = vmatprep.subr.mxu0 0.0
    %323 = vmatpush1.msra.mxu0 %v284
    %324 = vmatprep.subr.mxu0 0.0
    %325 = vmatpush1.msra.mxu0 0.0
    %326 = vmatprep.subr.mxu0 0.0
    %327 = vmatpush1.msra.mxu0 0.0
    %328 = vmatprep.subr.mxu0 0.0
    %329 = vmatpush1.msra.mxu0 0.0
    %330 = vmatprep.subr.mxu0 0.0
    %331 = vmatpush1.msra.mxu0 0.0
    %332 = vmatprep.subr.mxu0 0.0
    %333 = vmatpush1.msra.mxu0 0.0
    %334 = vmatprep.subr.mxu0 0.0
    %335 = vmatpush1.msra.mxu0 0.0
    %336 = vmatprep.subr.mxu0 0.0
    %337 = vmatpush1.msra.mxu0 0.0
    %338 = vmatprep.subr.mxu0 0.0
    %339 = vmatpush1.msra.mxu0 0.0
    %340 = vmatprep.subr.mxu0 0.0
    %341 = vmatpush1.msra.mxu0 0.0
    %342 = vmatprep.subr.mxu0 0.0
    %343 = vmatpush1.msra.mxu0 0.0
    %344 = vmatprep.subr.mxu0 0.0
    %345 = vmatpush1.msra.mxu0 0.0
    %346 = vmatprep.subr.mxu0 0.0
    %347 = vmatpush1.msra.mxu0 0.0
    %348 = vmatprep.subr.mxu0 0.0
    %349 = vmatpush1.msra.mxu0 0.0
    %350 = vmatprep.subr.mxu0 0.0
    %351 = vmatpush1.msra.mxu0 0.0
    %352 = vmatprep.subr.mxu0 0.0
    %353 = vmatpush1.msra.mxu0 0.0
    %354 = vmatprep.subr.mxu0 0.0
    %355 = vmatpush1.msra.mxu0 0.0
    %356 = vmatprep.mubr.f32.mxu0 0.0
    %357 = vmatmul.mubr.f32.gmra.mrb[0].mxu0 %v267
    %v358 = vpop.f32.mrb[0].mxu0
    %v359 = vadd.f32 %v290, %v358
    %v360 = vpop.f32.mrb[0].mxu0
    %361 = vmatprep.mubr.f32.mxu0 0.0
    %362 = vmatmul.mubr.f32.gmra.mrb[0].mxu0 %v268
    %v363 = vpop.f32.mrb[0].mxu0
    %v364 = vadd.f32 %v290, %v363
    %v365 = vpop.f32.mrb[0].mxu0
    %366 = vdwg.mxu0
    %367 = vst [vmem:[%s7] sm:$0xff] %v359
    %368 = vst [vmem:[%s7 + $0x8] sm:$0xff] %v364
    // Predicated region
    $region42: #{forward.1} parent=1 // pred_check
      _
    $region43: #{forward.1} parent=1 // pred_check_branch
      %370 = sbr.rel (0) target = $region45
    $region44: #{forward.1} parent=1 // pred_region
      _
    $region45: #{forward.1} parent=1 // pred_fallthru
      _
    // Predicated region
    $region46: #{forward.1} parent=1 // pred_check
      _
    $region47: #{forward.1} parent=1 // pred_check_branch
      %372 = sbr.rel (0) target = $region49
    $region48: #{forward.1} parent=1 // pred_region
      _
    $region49: #{forward.1} parent=1 // pred_fallthru
      _
    %373 = vsyncpa [#allocation3], 1
    %374 = vsyncpa [#allocation5], 1

</llo_original>
